<compile_context>
chip_gen: v7x
topology: tpu7x:2x2x1
jax: 0.10.0
libtpu: 0.0.40
codegen_flags: <defaults>
</compile_context>

<pallas_src>
import math

import numpy as np
import jax
import jax.numpy as jnp
from jax.experimental import pallas as pl
from jax.experimental.pallas import tpu as pltpu


# ---------------------------------------------------------------------------
# Pallas kernel: per block of images, Y[b] = R_h @ X[b] @ R_w^T  (two MXU dots)
# ---------------------------------------------------------------------------
def _upsample_kernel(x_ref, rh_ref, rwt_ref, o_ref):
    # x_ref : (TB, H_in,  W_in)   block of flattened (N*C) images
    # rh_ref: (H_out, H_in)       row-interpolation matrix (resident in VMEM)
    # rwt_ref:(W_in,  W_out)      column-interpolation matrix, pre-transposed
    # o_ref : (TB, H_out, W_out)
    rh = rh_ref[...]
    rwt = rwt_ref[...]
    tb = x_ref.shape[0]  # static block size -> unrolled loop of 2-D matmuls
    for b in range(tb):
        t = jnp.dot(rh, x_ref[b], preferred_element_type=jnp.float32)      # (H_out, W_in)
        o_ref[b] = jnp.dot(t, rwt, preferred_element_type=jnp.float32).astype(o_ref.dtype)


# ---------------------------------------------------------------------------
# Host-side (trace-time) construction of the tiny interpolation matrices
# ---------------------------------------------------------------------------
def _interp_matrix(out_size, in_size, mode, align_corners):
    if mode == "nearest":
        src = np.floor(np.arange(out_size) * (in_size / out_size)).astype(np.int64)
        src = np.clip(src, 0, in_size - 1)
        mat = np.zeros((out_size, in_size), dtype=np.float32)
        mat[np.arange(out_size), src] = 1.0
        return mat
    if mode in ("bilinear", "linear"):
        d = np.arange(out_size, dtype=np.float64)
        if align_corners:
            s = d * ((in_size - 1) / max(out_size - 1, 1)) if out_size > 1 else np.zeros_like(d)
        else:
            s = (d + 0.5) * (in_size / out_size) - 0.5
            s = np.maximum(s, 0.0)
        i0 = np.clip(np.floor(s).astype(np.int64), 0, in_size - 1)
        i1 = np.minimum(i0 + 1, in_size - 1)
        w1 = (s - i0).astype(np.float32)
        w0 = (1.0 - w1).astype(np.float32)
        mat = np.zeros((out_size, in_size), dtype=np.float32)
        np.add.at(mat, (np.arange(out_size), i0), w0)
        np.add.at(mat, (np.arange(out_size), i1), w1)
        return mat
    raise NotImplementedError(f"Upsample mode '{mode}' not supported")


def _pair(v):
    if isinstance(v, (tuple, list)):
        return float(v[0]), float(v[1])
    return float(v), float(v)


def _pick_block(nc, max_block=8):
    # Largest divisor of nc (<= max_block) that still leaves >= 2 grid steps,
    # so v7x's two TensorCores each get work; falls back to 1 for tiny nc.
    best = 1
    for tb in range(1, min(nc, max_block) + 1):
        if nc % tb == 0 and nc // tb >= 2:
            best = tb
    return best


# ---------------------------------------------------------------------------
# Wrapper equivalent to Upsample.forward / F.interpolate (nearest, bilinear)
# ---------------------------------------------------------------------------
def upsample(x, scale_factor, mode="nearest", align_corners=None):
    n, c, h, w = x.shape
    sh, sw = _pair(scale_factor)
    ho = int(math.floor(h * sh))
    wo = int(math.floor(w * sw))

    rh = jnp.asarray(_interp_matrix(ho, h, mode, align_corners), dtype=jnp.float32)
    rwt = jnp.asarray(_interp_matrix(wo, w, mode, align_corners).T, dtype=jnp.float32)

    nc = n * c
    x3 = x.reshape(nc, h, w).astype(jnp.float32)   # free reshape, no transpose

    tb = _pick_block(nc)
    grid = nc // tb

    # Advisory cost estimate: two small matmuls per image + one read/write of x/y.
    flops = 2 * nc * (ho * h * w + ho * w * wo)
    bytes_accessed = 4 * (nc * h * w + nc * ho * wo + ho * h + w * wo)

    y = pl.pallas_call(
        _upsample_kernel,
        out_shape=jax.ShapeDtypeStruct((nc, ho, wo), jnp.float32),
        grid_spec=pltpu.PrefetchScalarGridSpec(
            num_scalar_prefetch=0,
            grid=(grid,),
            in_specs=[
                pl.BlockSpec((tb, h, w), lambda i: (i, 0, 0)),
                pl.BlockSpec((ho, h), lambda i: (0, 0)),
                pl.BlockSpec((w, wo), lambda i: (0, 0)),
            ],
            out_specs=pl.BlockSpec((tb, ho, wo), lambda i: (i, 0, 0)),
        ),
        compiler_params=pltpu.CompilerParams(dimension_semantics=("parallel",)),
        cost_estimate=pl.CostEstimate(
            flops=flops, transcendentals=0, bytes_accessed=bytes_accessed),
    )(x3, rh, rwt)

    return y.reshape(n, c, ho, wo).astype(x.dtype)   # free reshape back to NCHW


# ---------------------------------------------------------------------------
# Pure-JAX reference (PyTorch interpolate semantics), gather-based
# ---------------------------------------------------------------------------
def _ref_upsample(x, scale_factor, mode="nearest", align_corners=None):
    n, c, h, w = x.shape
    sh, sw = _pair(scale_factor)
    ho = int(math.floor(h * sh))
    wo = int(math.floor(w * sw))

    if mode == "nearest":
        hi = jnp.clip(jnp.floor(jnp.arange(ho) * (h / ho)).astype(jnp.int32), 0, h - 1)
        wi = jnp.clip(jnp.floor(jnp.arange(wo) * (w / wo)).astype(jnp.int32), 0, w - 1)
        return x[:, :, hi, :][:, :, :, wi]

    def idx(out_size, in_size):
        d = jnp.arange(out_size, dtype=jnp.float32)
        if align_corners:
            s = d * ((in_size - 1) / max(out_size - 1, 1))
        else:
            s = jnp.maximum((d + 0.5) * (in_size / out_size) - 0.5, 0.0)
        i0 = jnp.clip(jnp.floor(s).astype(jnp.int32), 0, in_size - 1)
        i1 = jnp.minimum(i0 + 1, in_size - 1)
        w1 = s - i0.astype(jnp.float32)
        return i0, i1, 1.0 - w1, w1

    hi0, hi1, hw0, hw1 = idx(ho, h)
    wi0, wi1, ww0, ww1 = idx(wo, w)
    xh = (x[:, :, hi0, :] * hw0[None, None, :, None]
          + x[:, :, hi1, :] * hw1[None, None, :, None])
    return (xh[:, :, :, wi0] * ww0[None, None, None, :]
            + xh[:, :, :, wi1] * ww1[None, None, None, :])


if __name__ == "__main__":
    # Module config as used in fbnet_builder: Upsample(scale_factor=2, mode='nearest')
    N, C, H, W = 2, 4, 16, 16
    key = jax.random.PRNGKey(0)
    x = jax.random.normal(key, (N, C, H, W), dtype=jnp.float32)

    # nearest-neighbor path
    out_nn = jax.block_until_ready(upsample(x, scale_factor=2, mode="nearest"))
    ref_nn = _ref_upsample(x, scale_factor=2, mode="nearest")
    assert out_nn.shape == (N, C, 2 * H, 2 * W)
    assert float(jnp.max(jnp.abs(out_nn - ref_nn))) < 1e-5

    # bilinear path (align_corners=False), also covered by the module spec
    out_bl = jax.block_until_ready(
        upsample(x, scale_factor=2, mode="bilinear", align_corners=False))
    ref_bl = _ref_upsample(x, scale_factor=2, mode="bilinear", align_corners=False)
    assert out_bl.shape == (N, C, 2 * H, 2 * W)
    assert float(jnp.max(jnp.abs(out_bl - ref_bl))) < 1e-4

    print("KERNEL_OK")
</pallas_src>

<mosaic_0001>
module attributes {stable_mosaic.version = 11 : i64} {
  func.func @_upsample_kernel(%arg0: i32, %arg1: memref<4x16x16xf32, #tpu.memory_space<vmem>>, %arg2: memref<32x16xf32, #tpu.memory_space<vmem>>, %arg3: memref<16x32xf32, #tpu.memory_space<vmem>>, %arg4: memref<4x32x32xf32, #tpu.memory_space<vmem>>) attributes {dimension_semantics = [#tpu.dimension_semantics<parallel>], iteration_bounds = array<i64: 2>, scalar_prefetch = 0 : i64, scratch_operands = 0 : i64, tpu.core_type = #tpu.core_type<tc>, window_params = [{transform_indices = @transform_0, window_bounds = array<i64: 4, 16, 16>}, {pipeline_mode = #tpu.pipeline_mode<synchronous>, transform_indices = @transform_1, window_bounds = array<i64: 32, 16>}, {pipeline_mode = #tpu.pipeline_mode<synchronous>, transform_indices = @transform_2, window_bounds = array<i64: 16, 32>}, {transform_indices = @transform_3, window_bounds = array<i64: 4, 32, 32>}]} {
    %c0 = arith.constant 0 : index
    %c0_0 = arith.constant 0 : index
    %0 = vector.load %arg2[%c0, %c0_0] : memref<32x16xf32, #tpu.memory_space<vmem>>, vector<32x16xf32>
    %c0_1 = arith.constant 0 : index
    %c0_2 = arith.constant 0 : index
    %1 = vector.load %arg3[%c0_1, %c0_2] : memref<16x32xf32, #tpu.memory_space<vmem>>, vector<16x32xf32>
    %c0_3 = arith.constant 0 : index
    %c0_4 = arith.constant 0 : index
    %c0_5 = arith.constant 0 : index
    %2 = vector.load %arg1[%c0_3, %c0_4, %c0_5] : memref<4x16x16xf32, #tpu.memory_space<vmem>>, vector<1x16x16xf32>
    %3 = vector.shape_cast %2 : vector<1x16x16xf32> to vector<16x16xf32>
    %cst = arith.constant dense<0.000000e+00> : vector<32x16xf32>
    %4 = tpu.matmul %0, %3, %cst {dimension_numbers = #tpu.dot_dimension_numbers<[1], [0], [0], [1], [0, 0, 1, 1], [], []>} : vector<32x16xf32>, vector<16x16xf32>, vector<32x16xf32> -> vector<32x16xf32>
    %cst_6 = arith.constant dense<0.000000e+00> : vector<32x32xf32>
    %5 = tpu.matmul %4, %1, %cst_6 {dimension_numbers = #tpu.dot_dimension_numbers<[1], [0], [0], [1], [0, 0, 1, 1], [], []>} : vector<32x16xf32>, vector<16x32xf32>, vector<32x32xf32> -> vector<32x32xf32>
    %c0_7 = arith.constant 0 : index
    %c0_8 = arith.constant 0 : index
    %c0_9 = arith.constant 0 : index
    %6 = vector.load %arg4[%c0_7, %c0_8, %c0_9] : memref<4x32x32xf32, #tpu.memory_space<vmem>>, vector<1x32x32xf32>
    %7 = vector.shape_cast %6 : vector<1x32x32xf32> to vector<32x32xf32>
    %8 = vector.shape_cast %5 : vector<32x32xf32> to vector<1x32x32xf32>
    tpu.vector_store %arg4[%c0_7, %c0_8, %c0_9], %8 {strides = array<i32>} : memref<4x32x32xf32, #tpu.memory_space<vmem>>, vector<1x32x32xf32>,
    %c1 = arith.constant 1 : index
    %c0_10 = arith.constant 0 : index
    %c0_11 = arith.constant 0 : index
    %9 = vector.load %arg1[%c1, %c0_10, %c0_11] : memref<4x16x16xf32, #tpu.memory_space<vmem>>, vector<1x16x16xf32>
    %10 = vector.shape_cast %9 : vector<1x16x16xf32> to vector<16x16xf32>
    %cst_12 = arith.constant dense<0.000000e+00> : vector<32x16xf32>
    %11 = tpu.matmul %0, %10, %cst_12 {dimension_numbers = #tpu.dot_dimension_numbers<[1], [0], [0], [1], [0, 0, 1, 1], [], []>} : vector<32x16xf32>, vector<16x16xf32>, vector<32x16xf32> -> vector<32x16xf32>
    %cst_13 = arith.constant dense<0.000000e+00> : vector<32x32xf32>
    %12 = tpu.matmul %11, %1, %cst_13 {dimension_numbers = #tpu.dot_dimension_numbers<[1], [0], [0], [1], [0, 0, 1, 1], [], []>} : vector<32x16xf32>, vector<16x32xf32>, vector<32x32xf32> -> vector<32x32xf32>
    %c1_14 = arith.constant 1 : index
    %c0_15 = arith.constant 0 : index
    %c0_16 = arith.constant 0 : index
    %13 = vector.load %arg4[%c1_14, %c0_15, %c0_16] : memref<4x32x32xf32, #tpu.memory_space<vmem>>, vector<1x32x32xf32>
    %14 = vector.shape_cast %13 : vector<1x32x32xf32> to vector<32x32xf32>
    %15 = vector.shape_cast %12 : vector<32x32xf32> to vector<1x32x32xf32>
    tpu.vector_store %arg4[%c1_14, %c0_15, %c0_16], %15 {strides = array<i32>} : memref<4x32x32xf32, #tpu.memory_space<vmem>>, vector<1x32x32xf32>,
    %c2 = arith.constant 2 : index
    %c0_17 = arith.constant 0 : index
    %c0_18 = arith.constant 0 : index
    %16 = vector.load %arg1[%c2, %c0_17, %c0_18] : memref<4x16x16xf32, #tpu.memory_space<vmem>>, vector<1x16x16xf32>
    %17 = vector.shape_cast %16 : vector<1x16x16xf32> to vector<16x16xf32>
    %cst_19 = arith.constant dense<0.000000e+00> : vector<32x16xf32>
    %18 = tpu.matmul %0, %17, %cst_19 {dimension_numbers = #tpu.dot_dimension_numbers<[1], [0], [0], [1], [0, 0, 1, 1], [], []>} : vector<32x16xf32>, vector<16x16xf32>, vector<32x16xf32> -> vector<32x16xf32>
    %cst_20 = arith.constant dense<0.000000e+00> : vector<32x32xf32>
    %19 = tpu.matmul %18, %1, %cst_20 {dimension_numbers = #tpu.dot_dimension_numbers<[1], [0], [0], [1], [0, 0, 1, 1], [], []>} : vector<32x16xf32>, vector<16x32xf32>, vector<32x32xf32> -> vector<32x32xf32>
    %c2_21 = arith.constant 2 : index
    %c0_22 = arith.constant 0 : index
    %c0_23 = arith.constant 0 : index
    %20 = vector.load %arg4[%c2_21, %c0_22, %c0_23] : memref<4x32x32xf32, #tpu.memory_space<vmem>>, vector<1x32x32xf32>
    %21 = vector.shape_cast %20 : vector<1x32x32xf32> to vector<32x32xf32>
    %22 = vector.shape_cast %19 : vector<32x32xf32> to vector<1x32x32xf32>
    tpu.vector_store %arg4[%c2_21, %c0_22, %c0_23], %22 {strides = array<i32>} : memref<4x32x32xf32, #tpu.memory_space<vmem>>, vector<1x32x32xf32>,
    %c3 = arith.constant 3 : index
    %c0_24 = arith.constant 0 : index
    %c0_25 = arith.constant 0 : index
    %23 = vector.load %arg1[%c3, %c0_24, %c0_25] : memref<4x16x16xf32, #tpu.memory_space<vmem>>, vector<1x16x16xf32>
    %24 = vector.shape_cast %23 : vector<1x16x16xf32> to vector<16x16xf32>
    %cst_26 = arith.constant dense<0.000000e+00> : vector<32x16xf32>
    %25 = tpu.matmul %0, %24, %cst_26 {dimension_numbers = #tpu.dot_dimension_numbers<[1], [0], [0], [1], [0, 0, 1, 1], [], []>} : vector<32x16xf32>, vector<16x16xf32>, vector<32x16xf32> -> vector<32x16xf32>
    %cst_27 = arith.constant dense<0.000000e+00> : vector<32x32xf32>
    %26 = tpu.matmul %25, %1, %cst_27 {dimension_numbers = #tpu.dot_dimension_numbers<[1], [0], [0], [1], [0, 0, 1, 1], [], []>} : vector<32x16xf32>, vector<16x32xf32>, vector<32x32xf32> -> vector<32x32xf32>
    %c3_28 = arith.constant 3 : index
    %c0_29 = arith.constant 0 : index
    %c0_30 = arith.constant 0 : index
    %27 = vector.load %arg4[%c3_28, %c0_29, %c0_30] : memref<4x32x32xf32, #tpu.memory_space<vmem>>, vector<1x32x32xf32>
    %28 = vector.shape_cast %27 : vector<1x32x32xf32> to vector<32x32xf32>
    %29 = vector.shape_cast %26 : vector<32x32xf32> to vector<1x32x32xf32>
    tpu.vector_store %arg4[%c3_28, %c0_29, %c0_30], %29 {strides = array<i32>} : memref<4x32x32xf32, #tpu.memory_space<vmem>>, vector<1x32x32xf32>,
    return
  }
  func.func @transform_0(%arg0: i32) -> (i32, i32, i32) {
    %c0_i32 = arith.constant 0 : i32
    %c0_i32_0 = arith.constant 0 : i32
    %c0_i32_1 = arith.constant 0 : i32
    return %arg0, %c0_i32, %c0_i32_0 : i32, i32, i32
  }
  func.func @transform_1(%arg0: i32) -> (i32, i32) {
    %c0_i32 = arith.constant 0 : i32
    %c0_i32_0 = arith.constant 0 : i32
    %c0_i32_1 = arith.constant 0 : i32
    return %c0_i32, %c0_i32_0 : i32, i32
  }
  func.func @transform_2(%arg0: i32) -> (i32, i32) {
    %c0_i32 = arith.constant 0 : i32
    %c0_i32_0 = arith.constant 0 : i32
    %c0_i32_1 = arith.constant 0 : i32
    return %c0_i32, %c0_i32_0 : i32, i32
  }
  func.func @transform_3(%arg0: i32) -> (i32, i32, i32) {
    %c0_i32 = arith.constant 0 : i32
    %c0_i32_0 = arith.constant 0 : i32
    %c0_i32_1 = arith.constant 0 : i32
    return %arg0, %c0_i32, %c0_i32_0 : i32, i32, i32
  }
}

</mosaic_0001>

<llo_original>
// kernel: tpu_custom_call.1
$region0: #{tpu_custom_call.1}
  #allocation0 [shape = 'u32[]', space=smem, size = 0x4, offset = 0x4, fixed_abs, tag = 'smem constant byte address 0x4 - core index']
  #allocation1 [shape = 'u32[144,128]{1,0:T(1,128)}', space=vmem, size = 0x12000, scoped, tag = 'internal scratch']
  %s0 = inlined_call_operand.hbm [shape: f32[8,16,16], index: 0, kind: input, shape index: {}]
  %s1 = inlined_call_operand.vmem [shape: f32[32,16], index: 1, kind: input, shape index: {}]
  %s2 = inlined_call_operand.vmem [shape: f32[16,32], index: 2, kind: input, shape index: {}]
  %s3 = inlined_call_operand.hbm [shape: f32[8,32,32], index: 3, kind: output, shape index: {}]
  %s4 = sld [smem:[#allocation0]]
  $region49: #{tpu_custom_call.1} parent=0
    _
  %s6 = ssub.s32 1, %s4
  %s7 = scalar_select 0, %s6, %s4
  $region1: #{tpu_custom_call.1} parent=0
    #allocation2 [shape = 'u8[65536]{0}', space=vmem, size = 0x10000, scoped, tag = 'input window, operand 0']
    #allocation3 [shape = 's32[2]{0}', space=sflag, size = 0x8, scoped, tag = 'scoped memory for tpu_custom_call.1']
    #allocation4 [shape = 's32[2]{0}', space=sflag, size = 0x8, scoped, tag = 'scoped memory for tpu_custom_call.1']
    #allocation5 [shape = 'u8[131072]{0}', space=vmem, size = 0x20000, scoped, tag = 'output window, operand 0']
    %8 = vsyncpa [#allocation3], 0
    %s9 = scalar_lea.sflag [#allocation3], 1
    %10 = vsyncpa %s9, 0
    %11 = vsyncpa [#allocation4], 0
    %s12 = scalar_lea.sflag [#allocation4], 1
    %13 = vsyncpa %s12, 0
    loop: start=0, step=1, limit=4
    $region2: #{tpu_custom_call.1} parent=1 // loop_pre_header
      _
    $region3: #{tpu_custom_call.1} parent=1 // loop_header
      %s15 = sphi 0, %s19
      %p16 = scmp.ge.s32.totalorder %s15, 4
      %s25 = sphi 0, %s27
      %s28 = sphi 0, %s25
      %s29 = sphi 0, %s28
      %s45 = sphi 0, %s29
      %s49 = sphi 0, %s49
      %s51 = sphi 0, %s49
      %s52 = sphi 0, %s51
      %s66 = sphi 0, %s52
      %s70 = sphi 0, %s70
      %s72 = sphi 0, %s70
      %s73 = sphi 0, %s72
      %s87 = sphi 0, %s73
      %s93 = sphi 0, %s95
      %s96 = sphi 0, %s93
      %s97 = sphi 0, %s96
      %s113 = sphi 0, %s97
    $region4: #{tpu_custom_call.1} parent=1 // loop_header_branch
      %18 = sbr.rel (%p16) target = $region8
    $region5: #{tpu_custom_call.1} parent=1 // loop_body
      %s20 = ssub.s32 %s15, 1
      %s21 = ssub.s32 %s15, 2
      %s22 = sadd.s32 %s15, 1
      %s23 = ssub.s32 %s15, %s22
      %p24 = scmp.eq.s32.totalorder %s23, 0
      %s26 = sadd.s32 %s25, 1
      %s27 = scalar_select %p24, %s25, %s26
      %p30 = pneg %p24
      %p31 = scmp.eq.s32.totalorder %s15, 1
      %p32 = por %p30, %p31
      %p33 = scmp.ne.s32.totalorder %s25, %s28
      %p34 = scmp.eq.s32.totalorder %s15, 0
      %p35 = por %p33, %p34
      %p36 = scmp.ne.s32.totalorder %s25, %s28
      %p37 = scmp.eq.s32.totalorder %s20, 1
      %p38 = por %p36, %p37
      %p39 = scmp.ne.s32.totalorder %s28, %s29
      %p40 = scmp.eq.s32.totalorder %s20, 0
      %p41 = por %p39, %p40
      %p42 = scmp.ne.s32.totalorder %s28, %s29
      %p43 = scmp.eq.s32.totalorder %s21, 1
      %p44 = por %p42, %p43
      %p46 = scmp.ne.s32.totalorder %s29, %s45
      %p47 = scmp.eq.s32.totalorder %s21, 0
      %p48 = por %p46, %p47
      %s50 = sadd.s32 %s49, 1
      %p53 = scmp.eq.s32.totalorder %s15, 1
      %p54 = scmp.ne.s32.totalorder %s49, %s51
      %p55 = scmp.eq.s32.totalorder %s15, 0
      %p56 = por %p54, %p55
      %p57 = scmp.ne.s32.totalorder %s49, %s51
      %p58 = scmp.eq.s32.totalorder %s20, 1
      %p59 = por %p57, %p58
      %p60 = scmp.ne.s32.totalorder %s51, %s52
      %p61 = scmp.eq.s32.totalorder %s20, 0
      %p62 = por %p60, %p61
      %p63 = scmp.ne.s32.totalorder %s51, %s52
      %p64 = scmp.eq.s32.totalorder %s21, 1
      %p65 = por %p63, %p64
      %p67 = scmp.ne.s32.totalorder %s52, %s66
      %p68 = scmp.eq.s32.totalorder %s21, 0
      %p69 = por %p67, %p68
      %s71 = sadd.s32 %s70, 1
      %p74 = scmp.eq.s32.totalorder %s15, 1
      %p75 = scmp.ne.s32.totalorder %s70, %s72
      %p76 = scmp.eq.s32.totalorder %s15, 0
      %p77 = por %p75, %p76
      %p78 = scmp.ne.s32.totalorder %s70, %s72
      %p79 = scmp.eq.s32.totalorder %s20, 1
      %p80 = por %p78, %p79
      %p81 = scmp.ne.s32.totalorder %s72, %s73
      %p82 = scmp.eq.s32.totalorder %s20, 0
      %p83 = por %p81, %p82
      %p84 = scmp.ne.s32.totalorder %s72, %s73
      %p85 = scmp.eq.s32.totalorder %s21, 1
      %p86 = por %p84, %p85
      %p88 = scmp.ne.s32.totalorder %s73, %s87
      %p89 = scmp.eq.s32.totalorder %s21, 0
      %p90 = por %p88, %p89
      %s91 = ssub.s32 %s15, %s22
      %p92 = scmp.eq.s32.totalorder %s91, 0
      %s94 = sadd.s32 %s93, 1
      %s95 = scalar_select %p92, %s93, %s94
      %p98 = pneg %p92
      %p99 = scmp.eq.s32.totalorder %s15, 1
      %p100 = por %p98, %p99
      %p101 = scmp.ne.s32.totalorder %s93, %s96
      %p102 = scmp.eq.s32.totalorder %s15, 0
      %p103 = por %p101, %p102
      %p104 = scmp.ne.s32.totalorder %s93, %s96
      %p105 = scmp.eq.s32.totalorder %s20, 1
      %p106 = por %p104, %p105
      %p107 = scmp.ne.s32.totalorder %s96, %s97
      %p108 = scmp.eq.s32.totalorder %s20, 0
      %p109 = por %p107, %p108
      %p110 = scmp.ne.s32.totalorder %s96, %s97
      %p111 = scmp.eq.s32.totalorder %s21, 1
      %p112 = por %p110, %p111
      %p114 = scmp.ne.s32.totalorder %s97, %s113
      %p115 = scmp.eq.s32.totalorder %s21, 0
      %p116 = por %p114, %p115
      %p117 = scmp.le.s32.totalorder 1, %s15
      %p118 = scmp.lt.s32.totalorder %s15, 3
      %p119 = pnand %p117, %p118
      %p120 = pneg %p119
      // Predicated region
      $region9: #{tpu_custom_call.1} parent=5 // pred_check
        _
      $region10: #{tpu_custom_call.1} parent=5 // pred_check_branch
        %122 = sbr.rel (%p119) target = $region12
      $region11: #{tpu_custom_call.1} parent=5 // pred_region
        %s123 = ssub.s32 %s15, 1
        // Predicated region
        $region13: #{tpu_custom_call.1} parent=11 // pred_check
          %p124 = pneg %p62
        $region14: #{tpu_custom_call.1} parent=11 // pred_check_branch
          %126 = sbr.rel (%p124) target = $region16
        $region15: #{tpu_custom_call.1} parent=11 // pred_region
          _
        $region16: #{tpu_custom_call.1} parent=11 // pred_fallthru
          _
        // Predicated region
        $region17: #{tpu_custom_call.1} parent=11 // pred_check
          %p127 = pneg %p83
        $region18: #{tpu_custom_call.1} parent=11 // pred_check_branch
          %129 = sbr.rel (%p127) target = $region20
        $region19: #{tpu_custom_call.1} parent=11 // pred_region
          _
        $region20: #{tpu_custom_call.1} parent=11 // pred_fallthru
          _
      $region12: #{tpu_custom_call.1} parent=5 // pred_fallthru
        _
      %p130 = scmp.lt.s32.totalorder %s15, 2
      // Predicated region
      $region21: #{tpu_custom_call.1} parent=5 // pred_check
        %p131 = pneg %p130
      $region22: #{tpu_custom_call.1} parent=5 // pred_check_branch
        %133 = sbr.rel (%p131) target = $region24
      $region23: #{tpu_custom_call.1} parent=5 // pred_region
        // Predicated region
        $region25: #{tpu_custom_call.1} parent=23 // pred_check
          %p134 = pneg %p35
        $region26: #{tpu_custom_call.1} parent=23 // pred_check_branch
          %136 = sbr.rel (%p134) target = $region28
        $region27: #{tpu_custom_call.1} parent=23 // pred_region
          %s137 = sand.u32 %s25, 1
          %s138 = scalar_lea.sflag [#allocation3], %s137
          %s139 = sand.u32 %s25, 1
          %s140 = smul.addr %s139, 64
          %s141 = scalar_lea.vmem [#allocation2], %s140
          %s142 = smul.u32 4, %s15
          %s144 = ssub.s32 1024, 1024
          %145 = vsyncadd %s138, %s144
          %s146 = smul.addr %s142, 2
          %s147 = smul.addr %s146, 128
          %s148 = scalar_lea.hbm %s0, %s147
          %s149 = sshll.u32 %s141, 4
          %s150 = int_to_ptr.vmem [resolvable:$true] %s149
          %155 = dma.hbm_to_vmem [thread:$0]  %s148, 1024, %s150, %s138, 128, 128, 8
        $region28: #{tpu_custom_call.1} parent=23 // pred_fallthru
          _
      $region24: #{tpu_custom_call.1} parent=5 // pred_fallthru
        _
      %p156 = scmp.le.s32.totalorder 1, %s15
      %p157 = scmp.lt.s32.totalorder %s15, 3
      %p158 = pnand %p156, %p157
      %p159 = pneg %p158
      // Predicated region
      $region29: #{tpu_custom_call.1} parent=5 // pred_check
        _
      $region30: #{tpu_custom_call.1} parent=5 // pred_check_branch
        %161 = sbr.rel (%p158) target = $region32
      $region31: #{tpu_custom_call.1} parent=5 // pred_region
        %s162 = ssub.s32 %s15, 1
        %s163 = sand.u32 %s28, 1
        %s164 = scalar_lea.sflag [#allocation3], %s163
        %s165 = sand.u32 %s28, 1
        %s166 = smul.addr %s165, 64
        %s167 = scalar_lea.vmem [#allocation2], %s166
        // Predicated region
        $region33: #{tpu_custom_call.1} parent=31 // pred_check
          %p168 = pneg %p41
        $region34: #{tpu_custom_call.1} parent=31 // pred_check_branch
          %170 = sbr.rel (%p168) target = $region36
        $region35: #{tpu_custom_call.1} parent=31 // pred_region
          %171 = dma.done %s164, 1024
        $region36: #{tpu_custom_call.1} parent=31 // pred_fallthru
          _
        %s172 = sand.u32 %s28, 1
        %s173 = scalar_lea.sflag [#allocation3], %s172
        %s174 = sand.u32 %s28, 1
        %s175 = smul.addr %s174, 64
        %s176 = scalar_lea.vmem [#allocation2], %s175
        %p177 = pneg %p41
        %p178 = pneg %p38
        %p179 = pneg %p62
        %p180 = pneg %p59
        %p181 = pneg %p83
        %p182 = pneg %p80
        %p183 = pneg %p109
        %p184 = pneg %p106
        %s185 = sand.u32 %s96, 1
        %s186 = scalar_lea.sflag [#allocation4], %s185
        %s187 = sand.u32 %s96, 1
        %s188 = smul.addr %s187, 128
        %s189 = scalar_lea.vmem [#allocation5], %s188
        %s190 = smul.u32 4, %s20
        %s191 = smul.u32 4, %s20
        %v192 = vld [vmem:[%s1] sm:$0xff]
        %v193 = vld [vmem:[%s1 + $0x8] sm:$0xff]
        %v194 = vld [vmem:[%s1 + $0x10] sm:$0xff]
        %v195 = vld [vmem:[%s1 + $0x18] sm:$0xff]
        %v196 = vld [vmem:[%s2] sm:$0xff]
        %v197 = vld [vmem:[%s2 + $0x8] sm:$0xff]
        %v198 = vld [vmem:[%s167] sm:$0xff]
        %v199 = vld [vmem:[%s167 + $0x8] sm:$0xff]
        %vm200 = vcmask 130048
        %v202 = vsel %vm200, %v192, 0
        %v205 = vsel %vm200, %v193, 0
        %v208 = vsel %vm200, %v194, 0
        %v211 = vsel %vm200, %v195, 0
        %213 = vmatprep.subr.mxu0 0.0
        %214 = vmatpush1.msra.mxu0 %v198
        %215 = vmatprep.subr.mxu0 0.0
        %216 = vmatpush1.msra.mxu0 %v199
        %217 = vmatprep.subr.mxu0 0.0
        %218 = vmatpush1.msra.mxu0 0.0
        %219 = vmatprep.subr.mxu0 0.0
        %220 = vmatpush1.msra.mxu0 0.0
        %221 = vmatprep.subr.mxu0 0.0
        %222 = vmatpush1.msra.mxu0 0.0
        %223 = vmatprep.subr.mxu0 0.0
        %224 = vmatpush1.msra.mxu0 0.0
        %225 = vmatprep.subr.mxu0 0.0
        %226 = vmatpush1.msra.mxu0 0.0
        %227 = vmatprep.subr.mxu0 0.0
        %228 = vmatpush1.msra.mxu0 0.0
        %229 = vmatprep.subr.mxu0 0.0
        %230 = vmatpush1.msra.mxu0 0.0
        %231 = vmatprep.subr.mxu0 0.0
        %232 = vmatpush1.msra.mxu0 0.0
        %233 = vmatprep.subr.mxu0 0.0
        %234 = vmatpush1.msra.mxu0 0.0
        %235 = vmatprep.subr.mxu0 0.0
        %236 = vmatpush1.msra.mxu0 0.0
        %237 = vmatprep.subr.mxu0 0.0
        %238 = vmatpush1.msra.mxu0 0.0
        %239 = vmatprep.subr.mxu0 0.0
        %240 = vmatpush1.msra.mxu0 0.0
        %241 = vmatprep.subr.mxu0 0.0
        %242 = vmatpush1.msra.mxu0 0.0
        %243 = vmatprep.subr.mxu0 0.0
        %244 = vmatpush1.msra.mxu0 0.0
        %245 = vmatprep.subr.mxu0 0.0
        %246 = vmatpush1.msra.mxu0 0.0
        %247 = vmatprep.subr.mxu0 0.0
        %248 = vmatpush1.msra.mxu0 0.0
        %249 = vmatprep.subr.mxu0 0.0
        %250 = vmatpush1.msra.mxu0 0.0
        %251 = vmatprep.subr.mxu0 0.0
        %252 = vmatpush1.msra.mxu0 0.0
        %253 = vmatprep.subr.mxu0 0.0
        %254 = vmatpush1.msra.mxu0 0.0
        %255 = vmatprep.subr.mxu0 0.0
        %256 = vmatpush1.msra.mxu0 0.0
        %257 = vmatprep.subr.mxu0 0.0
        %258 = vmatpush1.msra.mxu0 0.0
        %259 = vmatprep.subr.mxu0 0.0
        %260 = vmatpush1.msra.mxu0 0.0
        %261 = vmatprep.subr.mxu0 0.0
        %262 = vmatpush1.msra.mxu0 0.0
        %263 = vmatprep.subr.mxu0 0.0
        %264 = vmatpush1.msra.mxu0 0.0
        %265 = vmatprep.subr.mxu0 0.0
        %266 = vmatpush1.msra.mxu0 0.0
        %267 = vmatprep.subr.mxu0 0.0
        %268 = vmatpush1.msra.mxu0 0.0
        %269 = vmatprep.subr.mxu0 0.0
        %270 = vmatpush1.msra.mxu0 0.0
        %271 = vmatprep.subr.mxu0 0.0
        %272 = vmatpush1.msra.mxu0 0.0
        %273 = vmatprep.subr.mxu0 0.0
        %274 = vmatpush1.msra.mxu0 0.0
        %275 = vmatprep.subr.mxu0 0.0
        %276 = vmatpush1.msra.mxu0 0.0
        %277 = vmatprep.mubr.f32.mxu0 0.0
        %278 = vmatmul.mubr.f32.gmra.mrb[0].mxu0 %v202
        %v279 = vpop.f32.mrb[0].mxu0
        %v280 = vadd.f32 0.0, %v279
        %v281 = vpop.f32.mrb[0].mxu0
        %282 = vmatprep.mubr.f32.mxu0 0.0
        %283 = vmatmul.mubr.f32.gmra.mrb[0].mxu0 %v205
        %v284 = vpop.f32.mrb[0].mxu0
        %v285 = vadd.f32 0.0, %v284
        %v286 = vpop.f32.mrb[0].mxu0
        %287 = vmatprep.mubr.f32.mxu0 0.0
        %288 = vmatmul.mubr.f32.gmra.mrb[0].mxu0 %v208
        %v289 = vpop.f32.mrb[0].mxu0
        %v290 = vadd.f32 0.0, %v289
        %v291 = vpop.f32.mrb[0].mxu0
        %292 = vmatprep.mubr.f32.mxu0 0.0
        %293 = vmatmul.mubr.f32.gmra.mrb[0].mxu0 %v211
        %v294 = vpop.f32.mrb[0].mxu0
        %v295 = vadd.f32 0.0, %v294
        %v296 = vpop.f32.mrb[0].mxu0
        %297 = vdwg.mxu0
        %v299 = vsel %vm200, %v280, 0
        %v302 = vsel %vm200, %v285, 0
        %v305 = vsel %vm200, %v290, 0
        %v308 = vsel %vm200, %v295, 0
        %310 = vmatprep.subr.mxu0 0.0
        %311 = vmatpush1.msra.mxu0 %v196
        %312 = vmatprep.subr.mxu0 0.0
        %313 = vmatpush1.msra.mxu0 %v197
        %314 = vmatprep.subr.mxu0 0.0
        %315 = vmatpush1.msra.mxu0 0.0
        %316 = vmatprep.subr.mxu0 0.0
        %317 = vmatpush1.msra.mxu0 0.0
        %318 = vmatprep.subr.mxu0 0.0
        %319 = vmatpush1.msra.mxu0 0.0
        %320 = vmatprep.subr.mxu0 0.0
        %321 = vmatpush1.msra.mxu0 0.0
        %322 = vmatprep.subr.mxu0 0.0
        %323 = vmatpush1.msra.mxu0 0.0
        %324 = vmatprep.subr.mxu0 0.0
        %325 = vmatpush1.msra.mxu0 0.0
        %326 = vmatprep.subr.mxu0 0.0
        %327 = vmatpush1.msra.mxu0 0.0
        %328 = vmatprep.subr.mxu0 0.0
        %329 = vmatpush1.msra.mxu0 0.0
        %330 = vmatprep.subr.mxu0 0.0
        %331 = vmatpush1.msra.mxu0 0.0
        %332 = vmatprep.subr.mxu0 0.0
        %333 = vmatpush1.msra.mxu0 0.0
        %334 = vmatprep.subr.mxu0 0.0
        %335 = vmatpush1.msra.mxu0 0.0
        %336 = vmatprep.subr.mxu0 0.0
        %337 = vmatpush1.msra.mxu0 0.0
        %338 = vmatprep.subr.mxu0 0.0
        %339 = vmatpush1.msra.mxu0 0.0
        %340 = vmatprep.subr.mxu0 0.0
        %341 = vmatpush1.msra.mxu0 0.0
        %342 = vmatprep.subr.mxu0 0.0
        %343 = vmatpush1.msra.mxu0 0.0
        %344 = vmatprep.subr.mxu0 0.0
        %345 = vmatpush1.msra.mxu0 0.0
        %346 = vmatprep.subr.mxu0 0.0
        %347 = vmatpush1.msra.mxu0 0.0
        %348 = vmatprep.subr.mxu0 0.0
        %349 = vmatpush1.msra.mxu0 0.0
        %350 = vmatprep.subr.mxu0 0.0
        %351 = vmatpush1.msra.mxu0 0.0
        %352 = vmatprep.subr.mxu0 0.0
        %353 = vmatpush1.msra.mxu0 0.0
        %354 = vmatprep.subr.mxu0 0.0
        %355 = vmatpush1.msra.mxu0 0.0
        %356 = vmatprep.subr.mxu0 0.0
        %357 = vmatpush1.msra.mxu0 0.0
        %358 = vmatprep.subr.mxu0 0.0
        %359 = vmatpush1.msra.mxu0 0.0
        %360 = vmatprep.subr.mxu0 0.0
        %361 = vmatpush1.msra.mxu0 0.0
        %362 = vmatprep.subr.mxu0 0.0
        %363 = vmatpush1.msra.mxu0 0.0
        %364 = vmatprep.subr.mxu0 0.0
        %365 = vmatpush1.msra.mxu0 0.0
        %366 = vmatprep.subr.mxu0 0.0
        %367 = vmatpush1.msra.mxu0 0.0
        %368 = vmatprep.subr.mxu0 0.0
        %369 = vmatpush1.msra.mxu0 0.0
        %370 = vmatprep.subr.mxu0 0.0
        %371 = vmatpush1.msra.mxu0 0.0
        %372 = vmatprep.subr.mxu0 0.0
        %373 = vmatpush1.msra.mxu0 0.0
        %374 = vmatprep.mubr.f32.mxu0 0.0
        %375 = vmatmul.mubr.f32.gmra.mrb[0].mxu0 %v299
        %v376 = vpop.f32.mrb[0].mxu0
        %v377 = vadd.f32 0.0, %v376
        %v378 = vpop.f32.mrb[0].mxu0
        %379 = vmatprep.mubr.f32.mxu0 0.0
        %380 = vmatmul.mubr.f32.gmra.mrb[0].mxu0 %v302
        %v381 = vpop.f32.mrb[0].mxu0
        %v382 = vadd.f32 0.0, %v381
        %v383 = vpop.f32.mrb[0].mxu0
        %384 = vmatprep.mubr.f32.mxu0 0.0
        %385 = vmatmul.mubr.f32.gmra.mrb[0].mxu0 %v305
        %v386 = vpop.f32.mrb[0].mxu0
        %v387 = vadd.f32 0.0, %v386
        %v388 = vpop.f32.mrb[0].mxu0
        %389 = vmatprep.mubr.f32.mxu0 0.0
        %390 = vmatmul.mubr.f32.gmra.mrb[0].mxu0 %v308
        %v391 = vpop.f32.mrb[0].mxu0
        %v392 = vadd.f32 0.0, %v391
        %v393 = vpop.f32.mrb[0].mxu0
        %394 = vdwg.mxu0
        %vm395 = vcmask 261120
        %396 = vst.msk [vmem:[%s189] sm:$0xff] %vm395, %v377
        %397 = vst.msk [vmem:[%s189 + $0x8] sm:$0xff] %vm395, %v382
        %398 = vst.msk [vmem:[%s189 + $0x10] sm:$0xff] %vm395, %v387
        %399 = vst.msk [vmem:[%s189 + $0x18] sm:$0xff] %vm395, %v392
        %s400 = scalar_lea.vmem %s167, 16 [#allocation2]
        %v401 = vld [vmem:[%s400] sm:$0xff]
        %v402 = vld [vmem:[%s400 + $0x8] sm:$0xff]
        %403 = vmatprep.subr.mxu0 0.0
        %404 = vmatpush1.msra.mxu0 %v401
        %405 = vmatprep.subr.mxu0 0.0
        %406 = vmatpush1.msra.mxu0 %v402
        %407 = vmatprep.subr.mxu0 0.0
        %408 = vmatpush1.msra.mxu0 0.0
        %409 = vmatprep.subr.mxu0 0.0
        %410 = vmatpush1.msra.mxu0 0.0
        %411 = vmatprep.subr.mxu0 0.0
        %412 = vmatpush1.msra.mxu0 0.0
        %413 = vmatprep.subr.mxu0 0.0
        %414 = vmatpush1.msra.mxu0 0.0
        %415 = vmatprep.subr.mxu0 0.0
        %416 = vmatpush1.msra.mxu0 0.0
        %417 = vmatprep.subr.mxu0 0.0
        %418 = vmatpush1.msra.mxu0 0.0
        %419 = vmatprep.subr.mxu0 0.0
        %420 = vmatpush1.msra.mxu0 0.0
        %421 = vmatprep.subr.mxu0 0.0
        %422 = vmatpush1.msra.mxu0 0.0
        %423 = vmatprep.subr.mxu0 0.0
        %424 = vmatpush1.msra.mxu0 0.0
        %425 = vmatprep.subr.mxu0 0.0
        %426 = vmatpush1.msra.mxu0 0.0
        %427 = vmatprep.subr.mxu0 0.0
        %428 = vmatpush1.msra.mxu0 0.0
        %429 = vmatprep.subr.mxu0 0.0
        %430 = vmatpush1.msra.mxu0 0.0
        %431 = vmatprep.subr.mxu0 0.0
        %432 = vmatpush1.msra.mxu0 0.0
        %433 = vmatprep.subr.mxu0 0.0
        %434 = vmatpush1.msra.mxu0 0.0
        %435 = vmatprep.subr.mxu0 0.0
        %436 = vmatpush1.msra.mxu0 0.0
        %437 = vmatprep.subr.mxu0 0.0
        %438 = vmatpush1.msra.mxu0 0.0
        %439 = vmatprep.subr.mxu0 0.0
        %440 = vmatpush1.msra.mxu0 0.0
        %441 = vmatprep.subr.mxu0 0.0
        %442 = vmatpush1.msra.mxu0 0.0
        %443 = vmatprep.subr.mxu0 0.0
        %444 = vmatpush1.msra.mxu0 0.0
        %445 = vmatprep.subr.mxu0 0.0
        %446 = vmatpush1.msra.mxu0 0.0
        %447 = vmatprep.subr.mxu0 0.0
        %448 = vmatpush1.msra.mxu0 0.0
        %449 = vmatprep.subr.mxu0 0.0
        %450 = vmatpush1.msra.mxu0 0.0
        %451 = vmatprep.subr.mxu0 0.0
        %452 = vmatpush1.msra.mxu0 0.0
        %453 = vmatprep.subr.mxu0 0.0
        %454 = vmatpush1.msra.mxu0 0.0
        %455 = vmatprep.subr.mxu0 0.0
        %456 = vmatpush1.msra.mxu0 0.0
        %457 = vmatprep.subr.mxu0 0.0
        %458 = vmatpush1.msra.mxu0 0.0
        %459 = vmatprep.subr.mxu0 0.0
        %460 = vmatpush1.msra.mxu0 0.0
        %461 = vmatprep.subr.mxu0 0.0
        %462 = vmatpush1.msra.mxu0 0.0
        %463 = vmatprep.subr.mxu0 0.0
        %464 = vmatpush1.msra.mxu0 0.0
        %465 = vmatprep.subr.mxu0 0.0
        %466 = vmatpush1.msra.mxu0 0.0
        %467 = vmatprep.mubr.f32.mxu0 0.0
        %468 = vmatmul.mubr.f32.gmra.mrb[0].mxu0 %v202
        %v469 = vpop.f32.mrb[0].mxu0
        %v470 = vadd.f32 0.0, %v469
        %v471 = vpop.f32.mrb[0].mxu0
        %472 = vmatprep.mubr.f32.mxu0 0.0
        %473 = vmatmul.mubr.f32.gmra.mrb[0].mxu0 %v205
        %v474 = vpop.f32.mrb[0].mxu0
        %v475 = vadd.f32 0.0, %v474
        %v476 = vpop.f32.mrb[0].mxu0
        %477 = vmatprep.mubr.f32.mxu0 0.0
        %478 = vmatmul.mubr.f32.gmra.mrb[0].mxu0 %v208
        %v479 = vpop.f32.mrb[0].mxu0
        %v480 = vadd.f32 0.0, %v479
        %v481 = vpop.f32.mrb[0].mxu0
        %482 = vmatprep.mubr.f32.mxu0 0.0
        %483 = vmatmul.mubr.f32.gmra.mrb[0].mxu0 %v211
        %v484 = vpop.f32.mrb[0].mxu0
        %v485 = vadd.f32 0.0, %v484
        %v486 = vpop.f32.mrb[0].mxu0
        %487 = vdwg.mxu0
        %v489 = vsel %vm200, %v470, 0
        %v492 = vsel %vm200, %v475, 0
        %v495 = vsel %vm200, %v480, 0
        %v498 = vsel %vm200, %v485, 0
        %500 = vmatprep.subr.mxu0 0.0
        %501 = vmatpush1.msra.mxu0 %v196
        %502 = vmatprep.subr.mxu0 0.0
        %503 = vmatpush1.msra.mxu0 %v197
        %504 = vmatprep.subr.mxu0 0.0
        %505 = vmatpush1.msra.mxu0 0.0
        %506 = vmatprep.subr.mxu0 0.0
        %507 = vmatpush1.msra.mxu0 0.0
        %508 = vmatprep.subr.mxu0 0.0
        %509 = vmatpush1.msra.mxu0 0.0
        %510 = vmatprep.subr.mxu0 0.0
        %511 = vmatpush1.msra.mxu0 0.0
        %512 = vmatprep.subr.mxu0 0.0
        %513 = vmatpush1.msra.mxu0 0.0
        %514 = vmatprep.subr.mxu0 0.0
        %515 = vmatpush1.msra.mxu0 0.0
        %516 = vmatprep.subr.mxu0 0.0
        %517 = vmatpush1.msra.mxu0 0.0
        %518 = vmatprep.subr.mxu0 0.0
        %519 = vmatpush1.msra.mxu0 0.0
        %520 = vmatprep.subr.mxu0 0.0
        %521 = vmatpush1.msra.mxu0 0.0
        %522 = vmatprep.subr.mxu0 0.0
        %523 = vmatpush1.msra.mxu0 0.0
        %524 = vmatprep.subr.mxu0 0.0
        %525 = vmatpush1.msra.mxu0 0.0
        %526 = vmatprep.subr.mxu0 0.0
        %527 = vmatpush1.msra.mxu0 0.0
        %528 = vmatprep.subr.mxu0 0.0
        %529 = vmatpush1.msra.mxu0 0.0
        %530 = vmatprep.subr.mxu0 0.0
        %531 = vmatpush1.msra.mxu0 0.0
        %532 = vmatprep.subr.mxu0 0.0
        %533 = vmatpush1.msra.mxu0 0.0
        %534 = vmatprep.subr.mxu0 0.0
        %535 = vmatpush1.msra.mxu0 0.0
        %536 = vmatprep.subr.mxu0 0.0
        %537 = vmatpush1.msra.mxu0 0.0
        %538 = vmatprep.subr.mxu0 0.0
        %539 = vmatpush1.msra.mxu0 0.0
        %540 = vmatprep.subr.mxu0 0.0
        %541 = vmatpush1.msra.mxu0 0.0
        %542 = vmatprep.subr.mxu0 0.0
        %543 = vmatpush1.msra.mxu0 0.0
        %544 = vmatprep.subr.mxu0 0.0
        %545 = vmatpush1.msra.mxu0 0.0
        %546 = vmatprep.subr.mxu0 0.0
        %547 = vmatpush1.msra.mxu0 0.0
        %548 = vmatprep.subr.mxu0 0.0
        %549 = vmatpush1.msra.mxu0 0.0
        %550 = vmatprep.subr.mxu0 0.0
        %551 = vmatpush1.msra.mxu0 0.0
        %552 = vmatprep.subr.mxu0 0.0
        %553 = vmatpush1.msra.mxu0 0.0
        %554 = vmatprep.subr.mxu0 0.0
        %555 = vmatpush1.msra.mxu0 0.0
        %556 = vmatprep.subr.mxu0 0.0
        %557 = vmatpush1.msra.mxu0 0.0
        %558 = vmatprep.subr.mxu0 0.0
        %559 = vmatpush1.msra.mxu0 0.0
        %560 = vmatprep.subr.mxu0 0.0
        %561 = vmatpush1.msra.mxu0 0.0
        %562 = vmatprep.subr.mxu0 0.0
        %563 = vmatpush1.msra.mxu0 0.0
        %564 = vmatprep.mubr.f32.mxu0 0.0
        %565 = vmatmul.mubr.f32.gmra.mrb[0].mxu0 %v489
        %v566 = vpop.f32.mrb[0].mxu0
        %v567 = vadd.f32 0.0, %v566
        %v568 = vpop.f32.mrb[0].mxu0
        %569 = vmatprep.mubr.f32.mxu0 0.0
        %570 = vmatmul.mubr.f32.gmra.mrb[0].mxu0 %v492
        %v571 = vpop.f32.mrb[0].mxu0
        %v572 = vadd.f32 0.0, %v571
        %v573 = vpop.f32.mrb[0].mxu0
        %574 = vmatprep.mubr.f32.mxu0 0.0
        %575 = vmatmul.mubr.f32.gmra.mrb[0].mxu0 %v495
        %v576 = vpop.f32.mrb[0].mxu0
        %v577 = vadd.f32 0.0, %v576
        %v578 = vpop.f32.mrb[0].mxu0
        %579 = vmatprep.mubr.f32.mxu0 0.0
        %580 = vmatmul.mubr.f32.gmra.mrb[0].mxu0 %v498
        %v581 = vpop.f32.mrb[0].mxu0
        %v582 = vadd.f32 0.0, %v581
        %v583 = vpop.f32.mrb[0].mxu0
        %584 = vdwg.mxu0
        %s585 = scalar_lea.vmem %s189, 32 [#allocation5]
        %586 = vst.msk [vmem:[%s585] sm:$0xff] %vm395, %v567
        %587 = vst.msk [vmem:[%s585 + $0x8] sm:$0xff] %vm395, %v572
        %588 = vst.msk [vmem:[%s585 + $0x10] sm:$0xff] %vm395, %v577
        %589 = vst.msk [vmem:[%s585 + $0x18] sm:$0xff] %vm395, %v582
        %s590 = scalar_lea.vmem %s167, 32 [#allocation2]
        %v591 = vld [vmem:[%s590] sm:$0xff]
        %v592 = vld [vmem:[%s590 + $0x8] sm:$0xff]
        %593 = vmatprep.subr.mxu0 0.0
        %594 = vmatpush1.msra.mxu0 %v591
        %595 = vmatprep.subr.mxu0 0.0
        %596 = vmatpush1.msra.mxu0 %v592
        %597 = vmatprep.subr.mxu0 0.0
        %598 = vmatpush1.msra.mxu0 0.0
        %599 = vmatprep.subr.mxu0 0.0
        %600 = vmatpush1.msra.mxu0 0.0
        %601 = vmatprep.subr.mxu0 0.0
        %602 = vmatpush1.msra.mxu0 0.0
        %603 = vmatprep.subr.mxu0 0.0
        %604 = vmatpush1.msra.mxu0 0.0
        %605 = vmatprep.subr.mxu0 0.0
        %606 = vmatpush1.msra.mxu0 0.0
        %607 = vmatprep.subr.mxu0 0.0
        %608 = vmatpush1.msra.mxu0 0.0
        %609 = vmatprep.subr.mxu0 0.0
        %610 = vmatpush1.msra.mxu0 0.0
        %611 = vmatprep.subr.mxu0 0.0
        %612 = vmatpush1.msra.mxu0 0.0
        %613 = vmatprep.subr.mxu0 0.0
        %614 = vmatpush1.msra.mxu0 0.0
        %615 = vmatprep.subr.mxu0 0.0
        %616 = vmatpush1.msra.mxu0 0.0
        %617 = vmatprep.subr.mxu0 0.0
        %618 = vmatpush1.msra.mxu0 0.0
        %619 = vmatprep.subr.mxu0 0.0
        %620 = vmatpush1.msra.mxu0 0.0
        %621 = vmatprep.subr.mxu0 0.0
        %622 = vmatpush1.msra.mxu0 0.0
        %623 = vmatprep.subr.mxu0 0.0
        %624 = vmatpush1.msra.mxu0 0.0
        %625 = vmatprep.subr.mxu0 0.0
        %626 = vmatpush1.msra.mxu0 0.0
        %627 = vmatprep.subr.mxu0 0.0
        %628 = vmatpush1.msra.mxu0 0.0
        %629 = vmatprep.subr.mxu0 0.0
        %630 = vmatpush1.msra.mxu0 0.0
        %631 = vmatprep.subr.mxu0 0.0
        %632 = vmatpush1.msra.mxu0 0.0
        %633 = vmatprep.subr.mxu0 0.0
        %634 = vmatpush1.msra.mxu0 0.0
        %635 = vmatprep.subr.mxu0 0.0
        %636 = vmatpush1.msra.mxu0 0.0
        %637 = vmatprep.subr.mxu0 0.0
        %638 = vmatpush1.msra.mxu0 0.0
        %639 = vmatprep.subr.mxu0 0.0
        %640 = vmatpush1.msra.mxu0 0.0
        %641 = vmatprep.subr.mxu0 0.0
        %642 = vmatpush1.msra.mxu0 0.0
        %643 = vmatprep.subr.mxu0 0.0
        %644 = vmatpush1.msra.mxu0 0.0
        %645 = vmatprep.subr.mxu0 0.0
        %646 = vmatpush1.msra.mxu0 0.0
        %647 = vmatprep.subr.mxu0 0.0
        %648 = vmatpush1.msra.mxu0 0.0
        %649 = vmatprep.subr.mxu0 0.0
        %650 = vmatpush1.msra.mxu0 0.0
        %651 = vmatprep.subr.mxu0 0.0
        %652 = vmatpush1.msra.mxu0 0.0
        %653 = vmatprep.subr.mxu0 0.0
        %654 = vmatpush1.msra.mxu0 0.0
        %655 = vmatprep.subr.mxu0 0.0
        %656 = vmatpush1.msra.mxu0 0.0
        %657 = vmatprep.mubr.f32.mxu0 0.0
        %658 = vmatmul.mubr.f32.gmra.mrb[0].mxu0 %v202
        %v659 = vpop.f32.mrb[0].mxu0
        %v660 = vadd.f32 0.0, %v659
        %v661 = vpop.f32.mrb[0].mxu0
        %662 = vmatprep.mubr.f32.mxu0 0.0
        %663 = vmatmul.mubr.f32.gmra.mrb[0].mxu0 %v205
        %v664 = vpop.f32.mrb[0].mxu0
        %v665 = vadd.f32 0.0, %v664
        %v666 = vpop.f32.mrb[0].mxu0
        %667 = vmatprep.mubr.f32.mxu0 0.0
        %668 = vmatmul.mubr.f32.gmra.mrb[0].mxu0 %v208
        %v669 = vpop.f32.mrb[0].mxu0
        %v670 = vadd.f32 0.0, %v669
        %v671 = vpop.f32.mrb[0].mxu0
        %672 = vmatprep.mubr.f32.mxu0 0.0
        %673 = vmatmul.mubr.f32.gmra.mrb[0].mxu0 %v211
        %v674 = vpop.f32.mrb[0].mxu0
        %v675 = vadd.f32 0.0, %v674
        %v676 = vpop.f32.mrb[0].mxu0
        %677 = vdwg.mxu0
        %v679 = vsel %vm200, %v660, 0
        %v682 = vsel %vm200, %v665, 0
        %v685 = vsel %vm200, %v670, 0
        %v688 = vsel %vm200, %v675, 0
        %690 = vmatprep.subr.mxu0 0.0
        %691 = vmatpush1.msra.mxu0 %v196
        %692 = vmatprep.subr.mxu0 0.0
        %693 = vmatpush1.msra.mxu0 %v197
        %694 = vmatprep.subr.mxu0 0.0
        %695 = vmatpush1.msra.mxu0 0.0
        %696 = vmatprep.subr.mxu0 0.0
        %697 = vmatpush1.msra.mxu0 0.0
        %698 = vmatprep.subr.mxu0 0.0
        %699 = vmatpush1.msra.mxu0 0.0
        %700 = vmatprep.subr.mxu0 0.0
        %701 = vmatpush1.msra.mxu0 0.0
        %702 = vmatprep.subr.mxu0 0.0
        %703 = vmatpush1.msra.mxu0 0.0
        %704 = vmatprep.subr.mxu0 0.0
        %705 = vmatpush1.msra.mxu0 0.0
        %706 = vmatprep.subr.mxu0 0.0
        %707 = vmatpush1.msra.mxu0 0.0
        %708 = vmatprep.subr.mxu0 0.0
        %709 = vmatpush1.msra.mxu0 0.0
        %710 = vmatprep.subr.mxu0 0.0
        %711 = vmatpush1.msra.mxu0 0.0
        %712 = vmatprep.subr.mxu0 0.0
        %713 = vmatpush1.msra.mxu0 0.0
        %714 = vmatprep.subr.mxu0 0.0
        %715 = vmatpush1.msra.mxu0 0.0
        %716 = vmatprep.subr.mxu0 0.0
        %717 = vmatpush1.msra.mxu0 0.0
        %718 = vmatprep.subr.mxu0 0.0
        %719 = vmatpush1.msra.mxu0 0.0
        %720 = vmatprep.subr.mxu0 0.0
        %721 = vmatpush1.msra.mxu0 0.0
        %722 = vmatprep.subr.mxu0 0.0
        %723 = vmatpush1.msra.mxu0 0.0
        %724 = vmatprep.subr.mxu0 0.0
        %725 = vmatpush1.msra.mxu0 0.0
        %726 = vmatprep.subr.mxu0 0.0
        %727 = vmatpush1.msra.mxu0 0.0
        %728 = vmatprep.subr.mxu0 0.0
        %729 = vmatpush1.msra.mxu0 0.0
        %730 = vmatprep.subr.mxu0 0.0
        %731 = vmatpush1.msra.mxu0 0.0
        %732 = vmatprep.subr.mxu0 0.0
        %733 = vmatpush1.msra.mxu0 0.0
        %734 = vmatprep.subr.mxu0 0.0
        %735 = vmatpush1.msra.mxu0 0.0
        %736 = vmatprep.subr.mxu0 0.0
        %737 = vmatpush1.msra.mxu0 0.0
        %738 = vmatprep.subr.mxu0 0.0
        %739 = vmatpush1.msra.mxu0 0.0
        %740 = vmatprep.subr.mxu0 0.0
        %741 = vmatpush1.msra.mxu0 0.0
        %742 = vmatprep.subr.mxu0 0.0
        %743 = vmatpush1.msra.mxu0 0.0
        %744 = vmatprep.subr.mxu0 0.0
        %745 = vmatpush1.msra.mxu0 0.0
        %746 = vmatprep.subr.mxu0 0.0
        %747 = vmatpush1.msra.mxu0 0.0
        %748 = vmatprep.subr.mxu0 0.0
        %749 = vmatpush1.msra.mxu0 0.0
        %750 = vmatprep.subr.mxu0 0.0
        %751 = vmatpush1.msra.mxu0 0.0
        %752 = vmatprep.subr.mxu0 0.0
        %753 = vmatpush1.msra.mxu0 0.0
        %754 = vmatprep.mubr.f32.mxu0 0.0
        %755 = vmatmul.mubr.f32.gmra.mrb[0].mxu0 %v679
        %v756 = vpop.f32.mrb[0].mxu0
        %v757 = vadd.f32 0.0, %v756
        %v758 = vpop.f32.mrb[0].mxu0
        %759 = vmatprep.mubr.f32.mxu0 0.0
        %760 = vmatmul.mubr.f32.gmra.mrb[0].mxu0 %v682
        %v761 = vpop.f32.mrb[0].mxu0
        %v762 = vadd.f32 0.0, %v761
        %v763 = vpop.f32.mrb[0].mxu0
        %764 = vmatprep.mubr.f32.mxu0 0.0
        %765 = vmatmul.mubr.f32.gmra.mrb[0].mxu0 %v685
        %v766 = vpop.f32.mrb[0].mxu0
        %v767 = vadd.f32 0.0, %v766
        %v768 = vpop.f32.mrb[0].mxu0
        %769 = vmatprep.mubr.f32.mxu0 0.0
        %770 = vmatmul.mubr.f32.gmra.mrb[0].mxu0 %v688
        %v771 = vpop.f32.mrb[0].mxu0
        %v772 = vadd.f32 0.0, %v771
        %v773 = vpop.f32.mrb[0].mxu0
        %774 = vdwg.mxu0
        %s775 = scalar_lea.vmem %s189, 64 [#allocation5]
        %776 = vst.msk [vmem:[%s775] sm:$0xff] %vm395, %v757
        %777 = vst.msk [vmem:[%s775 + $0x8] sm:$0xff] %vm395, %v762
        %778 = vst.msk [vmem:[%s775 + $0x10] sm:$0xff] %vm395, %v767
        %779 = vst.msk [vmem:[%s775 + $0x18] sm:$0xff] %vm395, %v772
        %s780 = scalar_lea.vmem %s167, 48 [#allocation2]
        %v781 = vld [vmem:[%s780] sm:$0xff]
        %v782 = vld [vmem:[%s780 + $0x8] sm:$0xff]
        %783 = vmatprep.subr.mxu0 0.0
        %784 = vmatpush1.msra.mxu0 %v781
        %785 = vmatprep.subr.mxu0 0.0
        %786 = vmatpush1.msra.mxu0 %v782
        %787 = vmatprep.subr.mxu0 0.0
        %788 = vmatpush1.msra.mxu0 0.0
        %789 = vmatprep.subr.mxu0 0.0
        %790 = vmatpush1.msra.mxu0 0.0
        %791 = vmatprep.subr.mxu0 0.0
        %792 = vmatpush1.msra.mxu0 0.0
        %793 = vmatprep.subr.mxu0 0.0
        %794 = vmatpush1.msra.mxu0 0.0
        %795 = vmatprep.subr.mxu0 0.0
        %796 = vmatpush1.msra.mxu0 0.0
        %797 = vmatprep.subr.mxu0 0.0
        %798 = vmatpush1.msra.mxu0 0.0
        %799 = vmatprep.subr.mxu0 0.0
        %800 = vmatpush1.msra.mxu0 0.0
        %801 = vmatprep.subr.mxu0 0.0
        %802 = vmatpush1.msra.mxu0 0.0
        %803 = vmatprep.subr.mxu0 0.0
        %804 = vmatpush1.msra.mxu0 0.0
        %805 = vmatprep.subr.mxu0 0.0
        %806 = vmatpush1.msra.mxu0 0.0
        %807 = vmatprep.subr.mxu0 0.0
        %808 = vmatpush1.msra.mxu0 0.0
        %809 = vmatprep.subr.mxu0 0.0
        %810 = vmatpush1.msra.mxu0 0.0
        %811 = vmatprep.subr.mxu0 0.0
        %812 = vmatpush1.msra.mxu0 0.0
        %813 = vmatprep.subr.mxu0 0.0
        %814 = vmatpush1.msra.mxu0 0.0
        %815 = vmatprep.subr.mxu0 0.0
        %816 = vmatpush1.msra.mxu0 0.0
        %817 = vmatprep.subr.mxu0 0.0
        %818 = vmatpush1.msra.mxu0 0.0
        %819 = vmatprep.subr.mxu0 0.0
        %820 = vmatpush1.msra.mxu0 0.0
        %821 = vmatprep.subr.mxu0 0.0
        %822 = vmatpush1.msra.mxu0 0.0
        %823 = vmatprep.subr.mxu0 0.0
        %824 = vmatpush1.msra.mxu0 0.0
        %825 = vmatprep.subr.mxu0 0.0
        %826 = vmatpush1.msra.mxu0 0.0
        %827 = vmatprep.subr.mxu0 0.0
        %828 = vmatpush1.msra.mxu0 0.0
        %829 = vmatprep.subr.mxu0 0.0
        %830 = vmatpush1.msra.mxu0 0.0
        %831 = vmatprep.subr.mxu0 0.0
        %832 = vmatpush1.msra.mxu0 0.0
        %833 = vmatprep.subr.mxu0 0.0
        %834 = vmatpush1.msra.mxu0 0.0
        %835 = vmatprep.subr.mxu0 0.0
        %836 = vmatpush1.msra.mxu0 0.0
        %837 = vmatprep.subr.mxu0 0.0
        %838 = vmatpush1.msra.mxu0 0.0
        %839 = vmatprep.subr.mxu0 0.0
        %840 = vmatpush1.msra.mxu0 0.0
        %841 = vmatprep.subr.mxu0 0.0
        %842 = vmatpush1.msra.mxu0 0.0
        %843 = vmatprep.subr.mxu0 0.0
        %844 = vmatpush1.msra.mxu0 0.0
        %845 = vmatprep.subr.mxu0 0.0
        %846 = vmatpush1.msra.mxu0 0.0
        %847 = vmatprep.mubr.f32.mxu0 0.0
        %848 = vmatmul.mubr.f32.gmra.mrb[0].mxu0 %v202
        %v849 = vpop.f32.mrb[0].mxu0
        %v850 = vadd.f32 0.0, %v849
        %v851 = vpop.f32.mrb[0].mxu0
        %852 = vmatprep.mubr.f32.mxu0 0.0
        %853 = vmatmul.mubr.f32.gmra.mrb[0].mxu0 %v205
        %v854 = vpop.f32.mrb[0].mxu0
        %v855 = vadd.f32 0.0, %v854
        %v856 = vpop.f32.mrb[0].mxu0
        %857 = vmatprep.mubr.f32.mxu0 0.0
        %858 = vmatmul.mubr.f32.gmra.mrb[0].mxu0 %v208
        %v859 = vpop.f32.mrb[0].mxu0
        %v860 = vadd.f32 0.0, %v859
        %v861 = vpop.f32.mrb[0].mxu0
        %862 = vmatprep.mubr.f32.mxu0 0.0
        %863 = vmatmul.mubr.f32.gmra.mrb[0].mxu0 %v211
        %v864 = vpop.f32.mrb[0].mxu0
        %v865 = vadd.f32 0.0, %v864
        %v866 = vpop.f32.mrb[0].mxu0
        %867 = vdwg.mxu0
        %v869 = vsel %vm200, %v850, 0
        %v872 = vsel %vm200, %v855, 0
        %v875 = vsel %vm200, %v860, 0
        %v878 = vsel %vm200, %v865, 0
        %880 = vmatprep.subr.mxu0 0.0
        %881 = vmatpush1.msra.mxu0 %v196
        %882 = vmatprep.subr.mxu0 0.0
        %883 = vmatpush1.msra.mxu0 %v197
        %884 = vmatprep.subr.mxu0 0.0
        %885 = vmatpush1.msra.mxu0 0.0
        %886 = vmatprep.subr.mxu0 0.0
        %887 = vmatpush1.msra.mxu0 0.0
        %888 = vmatprep.subr.mxu0 0.0
        %889 = vmatpush1.msra.mxu0 0.0
        %890 = vmatprep.subr.mxu0 0.0
        %891 = vmatpush1.msra.mxu0 0.0
        %892 = vmatprep.subr.mxu0 0.0
        %893 = vmatpush1.msra.mxu0 0.0
        %894 = vmatprep.subr.mxu0 0.0
        %895 = vmatpush1.msra.mxu0 0.0
        %896 = vmatprep.subr.mxu0 0.0
        %897 = vmatpush1.msra.mxu0 0.0
        %898 = vmatprep.subr.mxu0 0.0
        %899 = vmatpush1.msra.mxu0 0.0
        %900 = vmatprep.subr.mxu0 0.0
        %901 = vmatpush1.msra.mxu0 0.0
        %902 = vmatprep.subr.mxu0 0.0
        %903 = vmatpush1.msra.mxu0 0.0
        %904 = vmatprep.subr.mxu0 0.0
        %905 = vmatpush1.msra.mxu0 0.0
        %906 = vmatprep.subr.mxu0 0.0
        %907 = vmatpush1.msra.mxu0 0.0
        %908 = vmatprep.subr.mxu0 0.0
        %909 = vmatpush1.msra.mxu0 0.0
        %910 = vmatprep.subr.mxu0 0.0
        %911 = vmatpush1.msra.mxu0 0.0
        %912 = vmatprep.subr.mxu0 0.0
        %913 = vmatpush1.msra.mxu0 0.0
        %914 = vmatprep.subr.mxu0 0.0
        %915 = vmatpush1.msra.mxu0 0.0
        %916 = vmatprep.subr.mxu0 0.0
        %917 = vmatpush1.msra.mxu0 0.0
        %918 = vmatprep.subr.mxu0 0.0
        %919 = vmatpush1.msra.mxu0 0.0
        %920 = vmatprep.subr.mxu0 0.0
        %921 = vmatpush1.msra.mxu0 0.0
        %922 = vmatprep.subr.mxu0 0.0
        %923 = vmatpush1.msra.mxu0 0.0
        %924 = vmatprep.subr.mxu0 0.0
        %925 = vmatpush1.msra.mxu0 0.0
        %926 = vmatprep.subr.mxu0 0.0
        %927 = vmatpush1.msra.mxu0 0.0
        %928 = vmatprep.subr.mxu0 0.0
        %929 = vmatpush1.msra.mxu0 0.0
        %930 = vmatprep.subr.mxu0 0.0
        %931 = vmatpush1.msra.mxu0 0.0
        %932 = vmatprep.subr.mxu0 0.0
        %933 = vmatpush1.msra.mxu0 0.0
        %934 = vmatprep.subr.mxu0 0.0
        %935 = vmatpush1.msra.mxu0 0.0
        %936 = vmatprep.subr.mxu0 0.0
        %937 = vmatpush1.msra.mxu0 0.0
        %938 = vmatprep.subr.mxu0 0.0
        %939 = vmatpush1.msra.mxu0 0.0
        %940 = vmatprep.subr.mxu0 0.0
        %941 = vmatpush1.msra.mxu0 0.0
        %942 = vmatprep.subr.mxu0 0.0
        %943 = vmatpush1.msra.mxu0 0.0
        %944 = vmatprep.mubr.f32.mxu0 0.0
        %945 = vmatmul.mubr.f32.gmra.mrb[0].mxu0 %v869
        %v946 = vpop.f32.mrb[0].mxu0
        %v947 = vadd.f32 0.0, %v946
        %v948 = vpop.f32.mrb[0].mxu0
        %949 = vmatprep.mubr.f32.mxu0 0.0
        %950 = vmatmul.mubr.f32.gmra.mrb[0].mxu0 %v872
        %v951 = vpop.f32.mrb[0].mxu0
        %v952 = vadd.f32 0.0, %v951
        %v953 = vpop.f32.mrb[0].mxu0
        %954 = vmatprep.mubr.f32.mxu0 0.0
        %955 = vmatmul.mubr.f32.gmra.mrb[0].mxu0 %v875
        %v956 = vpop.f32.mrb[0].mxu0
        %v957 = vadd.f32 0.0, %v956
        %v958 = vpop.f32.mrb[0].mxu0
        %959 = vmatprep.mubr.f32.mxu0 0.0
        %960 = vmatmul.mubr.f32.gmra.mrb[0].mxu0 %v878
        %v961 = vpop.f32.mrb[0].mxu0
        %v962 = vadd.f32 0.0, %v961
        %v963 = vpop.f32.mrb[0].mxu0
        %964 = vdwg.mxu0
        %s965 = scalar_lea.vmem %s189, 96 [#allocation5]
        %966 = vst.msk [vmem:[%s965] sm:$0xff] %vm395, %v947
        %967 = vst.msk [vmem:[%s965 + $0x8] sm:$0xff] %vm395, %v952
        %968 = vst.msk [vmem:[%s965 + $0x10] sm:$0xff] %vm395, %v957
        %969 = vst.msk [vmem:[%s965 + $0x18] sm:$0xff] %vm395, %v962
        %s970 = sand.u32 %s96, 1
        %s971 = scalar_lea.sflag [#allocation4], %s970
        %s972 = sand.u32 %s96, 1
        %s973 = smul.addr %s972, 128
        %s974 = scalar_lea.vmem [#allocation5], %s973
        // Predicated region
        $region37: #{tpu_custom_call.1} parent=31 // pred_check
          %p975 = pneg %p106
        $region38: #{tpu_custom_call.1} parent=31 // pred_check_branch
          %977 = sbr.rel (%p975) target = $region40
        $region39: #{tpu_custom_call.1} parent=31 // pred_region
          %s978 = smul.u32 4, %s20
          %s980 = ssub.s32 2048, 2048
          %981 = vsyncadd %s971, %s980
          %s982 = smul.addr %s978, 4
          %s983 = smul.addr %s982, 128
          %s984 = scalar_lea.hbm %s3, %s983
          %s985 = sshll.u32 %s974, 4
          %s986 = int_to_ptr.vmem [resolvable:$true] %s985
          %991 = dma.vmem_to_hbm [thread:$0]  %s986, 2048, %s984, %s971, 128, 128, 8
        $region40: #{tpu_custom_call.1} parent=31 // pred_fallthru
          _
      $region32: #{tpu_custom_call.1} parent=5 // pred_fallthru
        _
      %p992 = scmp.le.s32.totalorder 2, %s15
      // Predicated region
      $region41: #{tpu_custom_call.1} parent=5 // pred_check
        %p993 = pneg %p992
      $region42: #{tpu_custom_call.1} parent=5 // pred_check_branch
        %995 = sbr.rel (%p993) target = $region44
      $region43: #{tpu_custom_call.1} parent=5 // pred_region
        %s996 = ssub.s32 %s15, 2
        // Predicated region
        $region45: #{tpu_custom_call.1} parent=43 // pred_check
          %p997 = pneg %p112
        $region46: #{tpu_custom_call.1} parent=43 // pred_check_branch
          %999 = sbr.rel (%p997) target = $region48
        $region47: #{tpu_custom_call.1} parent=43 // pred_region
          %s1000 = sand.u32 %s97, 1
          %s1001 = scalar_lea.sflag [#allocation4], %s1000
          %s1002 = sand.u32 %s97, 1
          %s1003 = smul.addr %s1002, 128
          %s1004 = scalar_lea.vmem [#allocation5], %s1003
          %1005 = dma.done %s1001, 2048
        $region48: #{tpu_custom_call.1} parent=43 // pred_fallthru
          _
      $region44: #{tpu_custom_call.1} parent=5 // pred_fallthru
        _
    $region6: #{tpu_custom_call.1} parent=1 // loop_footer
      %s19 = sadd.s32 1, %s15
    $region7: #{tpu_custom_call.1} parent=1 // loop_footer_branch
      %14 = sbr.rel target = $region3
    $region8: #{tpu_custom_call.1} parent=1 // loop_exit
      _
    %1006 = vsyncpa [#allocation3], 1
    %s1007 = scalar_lea.sflag [#allocation3], 1
    %1008 = vsyncpa %s1007, 1
    %1009 = vsyncpa [#allocation4], 1
    %s1010 = scalar_lea.sflag [#allocation4], 1
    %1011 = vsyncpa %s1010, 1

</llo_original>
